<compile_context>
chip_gen: v7x
topology: tpu7x:2x2x1
jax: 0.10.0
libtpu: 0.0.40
codegen_flags: <defaults>
</compile_context>

<pallas_src>
import jax
import jax.numpy as jnp
from jax.experimental import pallas as pl
from jax.experimental.pallas import tpu as pltpu

_TILE_B = 128  # poses per grid step (lane width; must be a multiple of 128)


def _pose_se3_kernel(rt_ref, prm_ref, out_ref):
    """rt_ref: (16, TB)  row k = Rt.flat[k] across poses (row-major 4x4)
       prm_ref: (8, TB)  rows 0..2 = dR, rows 3..5 = dt, rows 6..7 = padding
       out_ref: (16, TB) row k = (Rt @ ret).flat[k] across poses."""
    r0 = prm_ref[0:1, :]
    r1 = prm_ref[1:2, :]
    r2 = prm_ref[2:3, :]
    t0 = prm_ref[3:4, :]
    t1 = prm_ref[4:5, :]
    t2 = prm_ref[5:6, :]

    nrms = r0 * r0 + r1 * r1 + r2 * r2
    ang = jnp.sqrt(jnp.maximum(nrms, 1e-4))     # torch.clamp(nrms, 1e-4).sqrt()
    inv = 1.0 / ang                             # exact reciprocal (tolerance)
    fac1 = inv * jnp.sin(ang)
    fac2 = (inv * inv) * (1.0 - jnp.cos(ang))

    # Closed form: skew @ skew = r r^T - nrms * I  ->  no MXU matmul needed.
    f1r0 = fac1 * r0
    f1r1 = fac1 * r1
    f1r2 = fac1 * r2
    d = 1.0 - fac2 * nrms                       # shared diagonal term
    R00 = fac2 * (r0 * r0) + d
    R11 = fac2 * (r1 * r1) + d
    R22 = fac2 * (r2 * r2) + d
    c01 = fac2 * (r0 * r1)
    c02 = fac2 * (r0 * r2)
    c12 = fac2 * (r1 * r2)
    R01 = c01 - f1r2
    R10 = c01 + f1r2
    R02 = c02 + f1r1
    R20 = c02 - f1r1
    R12 = c12 - f1r0
    R21 = c12 + f1r0

    ret3 = ((R00, R01, R02), (R10, R11, R12), (R20, R21, R22))

    # out = Rt @ [[R3, t], [0 0 0 1]] as broadcast FMAs (one lane = one pose).
    for i in range(4):
        a0 = rt_ref[4 * i + 0: 4 * i + 1, :]
        a1 = rt_ref[4 * i + 1: 4 * i + 2, :]
        a2 = rt_ref[4 * i + 2: 4 * i + 3, :]
        a3 = rt_ref[4 * i + 3: 4 * i + 4, :]
        for j in range(3):
            out_ref[4 * i + j: 4 * i + j + 1, :] = (
                a0 * ret3[0][j] + a1 * ret3[1][j] + a2 * ret3[2][j])
        out_ref[4 * i + 3: 4 * i + 4, :] = a0 * t0 + a1 * t1 + a2 * t2 + a3


def pose_se3_forward_batched(Rt, dR, dt, is_learnable=True, tile_b=_TILE_B):
    """Batched Pallas equivalent of Pose_se3.forward().

    Rt: (B, 4, 4) f32, dR: (B, 3) f32, dt: (B, 3) f32  ->  (B, 4, 4) f32.
    """
    if not is_learnable:
        return Rt
    assert tile_b % 128 == 0
    B = Rt.shape[0]
    Bp = ((B + tile_b - 1) // tile_b) * tile_b

    # SoA, lane-dense layout: entries along sublanes, poses along lanes.
    rt_t = jnp.zeros((16, Bp), jnp.float32)
    rt_t = rt_t.at[:, :B].set(Rt.reshape(B, 16).astype(jnp.float32).T)
    prm = jnp.zeros((8, Bp), jnp.float32)
    prm = prm.at[0:3, :B].set(dR.astype(jnp.float32).T)
    prm = prm.at[3:6, :B].set(dt.astype(jnp.float32).T)

    out_t = pl.pallas_call(
        _pose_se3_kernel,
        out_shape=jax.ShapeDtypeStruct((16, Bp), jnp.float32),
        grid_spec=pltpu.PrefetchScalarGridSpec(
            num_scalar_prefetch=0,
            grid=(Bp // tile_b,),
            in_specs=[
                pl.BlockSpec((16, tile_b), lambda i: (0, i)),   # Rt (SoA)
                pl.BlockSpec((8, tile_b), lambda i: (0, i)),    # [dR; dt]
            ],
            out_specs=pl.BlockSpec((16, tile_b), lambda i: (0, i)),
        ),
        compiler_params=pltpu.CompilerParams(
            dimension_semantics=("parallel",)),
    )(rt_t, prm)

    return out_t.T[:B].reshape(B, 4, 4)


def pose_se3_forward(Rt, dR, dt, is_learnable=True):
    """Single-pose forward with the exact semantics of the PyTorch module."""
    if not is_learnable:
        return Rt
    return pose_se3_forward_batched(Rt[None], dR[None], dt[None])[0]


def pose_se3_ref(Rt, dR, dt):
    """Pure-JAX reference (mirrors the PyTorch forward, single pose)."""
    nrms = jnp.sum(dR * dR)
    ang = jnp.sqrt(jnp.maximum(nrms, 1e-4))
    inv = 1.0 / ang
    fac1 = inv * jnp.sin(ang)
    fac2 = inv * inv * (1.0 - jnp.cos(ang))
    skew = jnp.array(
        [[0.0, -dR[2], dR[1]],
         [dR[2], 0.0, -dR[0]],
         [-dR[1], dR[0], 0.0]], dtype=jnp.float32)
    R3 = fac1 * skew + fac2 * (skew @ skew) + jnp.eye(3, dtype=jnp.float32)
    ret = jnp.eye(4, dtype=jnp.float32)
    ret = ret.at[:3, :3].set(R3).at[:3, 3].set(dt)
    return Rt @ ret


if __name__ == "__main__":
    key = jax.random.PRNGKey(0)
    k_rt, k_dr, k_dt = jax.random.split(key, 3)

    # Small batch of pose-like 4x4 matrices (random upper block, [0,0,0,1] row).
    B = 16
    Rt = jax.random.normal(k_rt, (B, 4, 4), dtype=jnp.float32)
    Rt = Rt.at[:, 3, :].set(jnp.array([0.0, 0.0, 0.0, 1.0], dtype=jnp.float32))

    # Parameters dR, dt (module __init__ uses zeros; use small random values so
    # the Rodrigues path is actually exercised).
    dR = 0.3 * jax.random.normal(k_dr, (B, 3), dtype=jnp.float32)
    dt = 0.5 * jax.random.normal(k_dt, (B, 3), dtype=jnp.float32)

    # Batched kernel vs vmapped reference.
    out_b = jax.block_until_ready(pose_se3_forward_batched(Rt, dR, dt))
    ref_b = jax.vmap(pose_se3_ref)(Rt, dR, dt)
    assert out_b.shape == (B, 4, 4) and out_b.dtype == jnp.float32
    assert bool(jnp.allclose(out_b, ref_b, atol=1e-5, rtol=1e-5)), "batched mismatch"

    # Single-pose path (module-faithful API) vs reference.
    out_1 = jax.block_until_ready(pose_se3_forward(Rt[0], dR[0], dt[0]))
    assert bool(jnp.allclose(out_1, ref_b[0], atol=1e-5, rtol=1e-5)), "single mismatch"

    # is_learnable=False path returns Rt unchanged.
    assert bool(jnp.allclose(pose_se3_forward(Rt[0], dR[0], dt[0],
                                              is_learnable=False), Rt[0]))

    # TODO(synk): to_qt() (matrix_to_quaternion) is a post-processing utility
    # with a data-dependent argmax gather; left in plain JAX land / not kernelized.
    print("KERNEL_OK")
</pallas_src>

<mosaic_0001>
module attributes {stable_mosaic.version = 11 : i64} {
  func.func @_pose_se3_kernel(%arg0: i32, %arg1: memref<16x128xf32, #tpu.memory_space<vmem>>, %arg2: memref<8x128xf32, #tpu.memory_space<vmem>>, %arg3: memref<16x128xf32, #tpu.memory_space<vmem>>) attributes {dimension_semantics = [#tpu.dimension_semantics<parallel>], iteration_bounds = array<i64: 1>, scalar_prefetch = 0 : i64, scratch_operands = 0 : i64, tpu.core_type = #tpu.core_type<tc>, window_params = [{transform_indices = @transform_0, window_bounds = array<i64: 16, 128>}, {transform_indices = @transform_1, window_bounds = array<i64: 8, 128>}, {transform_indices = @transform_2, window_bounds = array<i64: 16, 128>}]} {
    %c0 = arith.constant 0 : index
    %c0_0 = arith.constant 0 : index
    %0 = vector.load %arg2[%c0, %c0_0] : memref<8x128xf32, #tpu.memory_space<vmem>>, vector<1x128xf32>
    %c1 = arith.constant 1 : index
    %c0_1 = arith.constant 0 : index
    %1 = vector.load %arg2[%c1, %c0_1] : memref<8x128xf32, #tpu.memory_space<vmem>>, vector<1x128xf32>
    %c2 = arith.constant 2 : index
    %c0_2 = arith.constant 0 : index
    %2 = vector.load %arg2[%c2, %c0_2] : memref<8x128xf32, #tpu.memory_space<vmem>>, vector<1x128xf32>
    %c3 = arith.constant 3 : index
    %c0_3 = arith.constant 0 : index
    %3 = vector.load %arg2[%c3, %c0_3] : memref<8x128xf32, #tpu.memory_space<vmem>>, vector<1x128xf32>
    %c4 = arith.constant 4 : index
    %c0_4 = arith.constant 0 : index
    %4 = vector.load %arg2[%c4, %c0_4] : memref<8x128xf32, #tpu.memory_space<vmem>>, vector<1x128xf32>
    %c5 = arith.constant 5 : index
    %c0_5 = arith.constant 0 : index
    %5 = vector.load %arg2[%c5, %c0_5] : memref<8x128xf32, #tpu.memory_space<vmem>>, vector<1x128xf32>
    %6 = arith.mulf %0, %0 : vector<1x128xf32>
    %7 = arith.mulf %1, %1 : vector<1x128xf32>
    %8 = arith.addf %6, %7 : vector<1x128xf32>
    %9 = arith.mulf %2, %2 : vector<1x128xf32>
    %10 = arith.addf %8, %9 : vector<1x128xf32>
    %cst = arith.constant 9.99999974E-5 : f32
    %11 = vector.broadcast %cst : f32 to vector<1x128xf32>
    %12 = arith.maximumf %10, %11 : vector<1x128xf32>
    %13 = math.sqrt %12 : vector<1x128xf32>
    %cst_6 = arith.constant 1.000000e+00 : f32
    %14 = vector.broadcast %cst_6 : f32 to vector<1x128xf32>
    %15 = arith.divf %14, %13 : vector<1x128xf32>
    %16 = math.sin %13 : vector<1x128xf32>
    %17 = arith.mulf %15, %16 : vector<1x128xf32>
    %18 = arith.mulf %15, %15 : vector<1x128xf32>
    %19 = math.cos %13 : vector<1x128xf32>
    %cst_7 = arith.constant 1.000000e+00 : f32
    %20 = vector.broadcast %cst_7 : f32 to vector<1x128xf32>
    %21 = arith.subf %20, %19 : vector<1x128xf32>
    %22 = arith.mulf %18, %21 : vector<1x128xf32>
    %23 = arith.mulf %17, %0 : vector<1x128xf32>
    %24 = arith.mulf %17, %1 : vector<1x128xf32>
    %25 = arith.mulf %17, %2 : vector<1x128xf32>
    %26 = arith.mulf %22, %10 : vector<1x128xf32>
    %cst_8 = arith.constant 1.000000e+00 : f32
    %27 = vector.broadcast %cst_8 : f32 to vector<1x128xf32>
    %28 = arith.subf %27, %26 : vector<1x128xf32>
    %29 = arith.mulf %0, %0 : vector<1x128xf32>
    %30 = arith.mulf %22, %29 : vector<1x128xf32>
    %31 = arith.addf %30, %28 : vector<1x128xf32>
    %32 = arith.mulf %1, %1 : vector<1x128xf32>
    %33 = arith.mulf %22, %32 : vector<1x128xf32>
    %34 = arith.addf %33, %28 : vector<1x128xf32>
    %35 = arith.mulf %2, %2 : vector<1x128xf32>
    %36 = arith.mulf %22, %35 : vector<1x128xf32>
    %37 = arith.addf %36, %28 : vector<1x128xf32>
    %38 = arith.mulf %0, %1 : vector<1x128xf32>
    %39 = arith.mulf %22, %38 : vector<1x128xf32>
    %40 = arith.mulf %0, %2 : vector<1x128xf32>
    %41 = arith.mulf %22, %40 : vector<1x128xf32>
    %42 = arith.mulf %1, %2 : vector<1x128xf32>
    %43 = arith.mulf %22, %42 : vector<1x128xf32>
    %44 = arith.subf %39, %25 : vector<1x128xf32>
    %45 = arith.addf %39, %25 : vector<1x128xf32>
    %46 = arith.addf %41, %24 : vector<1x128xf32>
    %47 = arith.subf %41, %24 : vector<1x128xf32>
    %48 = arith.subf %43, %23 : vector<1x128xf32>
    %49 = arith.addf %43, %23 : vector<1x128xf32>
    %c0_9 = arith.constant 0 : index
    %c0_10 = arith.constant 0 : index
    %50 = vector.load %arg1[%c0_9, %c0_10] : memref<16x128xf32, #tpu.memory_space<vmem>>, vector<1x128xf32>
    %c1_11 = arith.constant 1 : index
    %c0_12 = arith.constant 0 : index
    %51 = vector.load %arg1[%c1_11, %c0_12] : memref<16x128xf32, #tpu.memory_space<vmem>>, vector<1x128xf32>
    %c2_13 = arith.constant 2 : index
    %c0_14 = arith.constant 0 : index
    %52 = vector.load %arg1[%c2_13, %c0_14] : memref<16x128xf32, #tpu.memory_space<vmem>>, vector<1x128xf32>
    %c3_15 = arith.constant 3 : index
    %c0_16 = arith.constant 0 : index
    %53 = vector.load %arg1[%c3_15, %c0_16] : memref<16x128xf32, #tpu.memory_space<vmem>>, vector<1x128xf32>
    %54 = arith.mulf %50, %31 : vector<1x128xf32>
    %55 = arith.mulf %51, %45 : vector<1x128xf32>
    %56 = arith.addf %54, %55 : vector<1x128xf32>
    %57 = arith.mulf %52, %47 : vector<1x128xf32>
    %58 = arith.addf %56, %57 : vector<1x128xf32>
    %c0_17 = arith.constant 0 : index
    %c0_18 = arith.constant 0 : index
    %59 = vector.load %arg3[%c0_17, %c0_18] : memref<16x128xf32, #tpu.memory_space<vmem>>, vector<1x128xf32>
    tpu.vector_store %arg3[%c0_17, %c0_18], %58 {strides = array<i32>} : memref<16x128xf32, #tpu.memory_space<vmem>>, vector<1x128xf32>,
    %60 = arith.mulf %50, %44 : vector<1x128xf32>
    %61 = arith.mulf %51, %34 : vector<1x128xf32>
    %62 = arith.addf %60, %61 : vector<1x128xf32>
    %63 = arith.mulf %52, %49 : vector<1x128xf32>
    %64 = arith.addf %62, %63 : vector<1x128xf32>
    %c1_19 = arith.constant 1 : index
    %c0_20 = arith.constant 0 : index
    %65 = vector.load %arg3[%c1_19, %c0_20] : memref<16x128xf32, #tpu.memory_space<vmem>>, vector<1x128xf32>
    tpu.vector_store %arg3[%c1_19, %c0_20], %64 {strides = array<i32>} : memref<16x128xf32, #tpu.memory_space<vmem>>, vector<1x128xf32>,
    %66 = arith.mulf %50, %46 : vector<1x128xf32>
    %67 = arith.mulf %51, %48 : vector<1x128xf32>
    %68 = arith.addf %66, %67 : vector<1x128xf32>
    %69 = arith.mulf %52, %37 : vector<1x128xf32>
    %70 = arith.addf %68, %69 : vector<1x128xf32>
    %c2_21 = arith.constant 2 : index
    %c0_22 = arith.constant 0 : index
    %71 = vector.load %arg3[%c2_21, %c0_22] : memref<16x128xf32, #tpu.memory_space<vmem>>, vector<1x128xf32>
    tpu.vector_store %arg3[%c2_21, %c0_22], %70 {strides = array<i32>} : memref<16x128xf32, #tpu.memory_space<vmem>>, vector<1x128xf32>,
    %72 = arith.mulf %50, %3 : vector<1x128xf32>
    %73 = arith.mulf %51, %4 : vector<1x128xf32>
    %74 = arith.addf %72, %73 : vector<1x128xf32>
    %75 = arith.mulf %52, %5 : vector<1x128xf32>
    %76 = arith.addf %74, %75 : vector<1x128xf32>
    %77 = arith.addf %76, %53 : vector<1x128xf32>
    %c3_23 = arith.constant 3 : index
    %c0_24 = arith.constant 0 : index
    %78 = vector.load %arg3[%c3_23, %c0_24] : memref<16x128xf32, #tpu.memory_space<vmem>>, vector<1x128xf32>
    tpu.vector_store %arg3[%c3_23, %c0_24], %77 {strides = array<i32>} : memref<16x128xf32, #tpu.memory_space<vmem>>, vector<1x128xf32>,
    %c4_25 = arith.constant 4 : index
    %c0_26 = arith.constant 0 : index
    %79 = vector.load %arg1[%c4_25, %c0_26] : memref<16x128xf32, #tpu.memory_space<vmem>>, vector<1x128xf32>
    %c5_27 = arith.constant 5 : index
    %c0_28 = arith.constant 0 : index
    %80 = vector.load %arg1[%c5_27, %c0_28] : memref<16x128xf32, #tpu.memory_space<vmem>>, vector<1x128xf32>
    %c6 = arith.constant 6 : index
    %c0_29 = arith.constant 0 : index
    %81 = vector.load %arg1[%c6, %c0_29] : memref<16x128xf32, #tpu.memory_space<vmem>>, vector<1x128xf32>
    %c7 = arith.constant 7 : index
    %c0_30 = arith.constant 0 : index
    %82 = vector.load %arg1[%c7, %c0_30] : memref<16x128xf32, #tpu.memory_space<vmem>>, vector<1x128xf32>
    %83 = arith.mulf %79, %31 : vector<1x128xf32>
    %84 = arith.mulf %80, %45 : vector<1x128xf32>
    %85 = arith.addf %83, %84 : vector<1x128xf32>
    %86 = arith.mulf %81, %47 : vector<1x128xf32>
    %87 = arith.addf %85, %86 : vector<1x128xf32>
    %c4_31 = arith.constant 4 : index
    %c0_32 = arith.constant 0 : index
    %88 = vector.load %arg3[%c4_31, %c0_32] : memref<16x128xf32, #tpu.memory_space<vmem>>, vector<1x128xf32>
    tpu.vector_store %arg3[%c4_31, %c0_32], %87 {strides = array<i32>} : memref<16x128xf32, #tpu.memory_space<vmem>>, vector<1x128xf32>,
    %89 = arith.mulf %79, %44 : vector<1x128xf32>
    %90 = arith.mulf %80, %34 : vector<1x128xf32>
    %91 = arith.addf %89, %90 : vector<1x128xf32>
    %92 = arith.mulf %81, %49 : vector<1x128xf32>
    %93 = arith.addf %91, %92 : vector<1x128xf32>
    %c5_33 = arith.constant 5 : index
    %c0_34 = arith.constant 0 : index
    %94 = vector.load %arg3[%c5_33, %c0_34] : memref<16x128xf32, #tpu.memory_space<vmem>>, vector<1x128xf32>
    tpu.vector_store %arg3[%c5_33, %c0_34], %93 {strides = array<i32>} : memref<16x128xf32, #tpu.memory_space<vmem>>, vector<1x128xf32>,
    %95 = arith.mulf %79, %46 : vector<1x128xf32>
    %96 = arith.mulf %80, %48 : vector<1x128xf32>
    %97 = arith.addf %95, %96 : vector<1x128xf32>
    %98 = arith.mulf %81, %37 : vector<1x128xf32>
    %99 = arith.addf %97, %98 : vector<1x128xf32>
    %c6_35 = arith.constant 6 : index
    %c0_36 = arith.constant 0 : index
    %100 = vector.load %arg3[%c6_35, %c0_36] : memref<16x128xf32, #tpu.memory_space<vmem>>, vector<1x128xf32>
    tpu.vector_store %arg3[%c6_35, %c0_36], %99 {strides = array<i32>} : memref<16x128xf32, #tpu.memory_space<vmem>>, vector<1x128xf32>,
    %101 = arith.mulf %79, %3 : vector<1x128xf32>
    %102 = arith.mulf %80, %4 : vector<1x128xf32>
    %103 = arith.addf %101, %102 : vector<1x128xf32>
    %104 = arith.mulf %81, %5 : vector<1x128xf32>
    %105 = arith.addf %103, %104 : vector<1x128xf32>
    %106 = arith.addf %105, %82 : vector<1x128xf32>
    %c7_37 = arith.constant 7 : index
    %c0_38 = arith.constant 0 : index
    %107 = vector.load %arg3[%c7_37, %c0_38] : memref<16x128xf32, #tpu.memory_space<vmem>>, vector<1x128xf32>
    tpu.vector_store %arg3[%c7_37, %c0_38], %106 {strides = array<i32>} : memref<16x128xf32, #tpu.memory_space<vmem>>, vector<1x128xf32>,
    %c8 = arith.constant 8 : index
    %c0_39 = arith.constant 0 : index
    %108 = vector.load %arg1[%c8, %c0_39] : memref<16x128xf32, #tpu.memory_space<vmem>>, vector<1x128xf32>
    %c9 = arith.constant 9 : index
    %c0_40 = arith.constant 0 : index
    %109 = vector.load %arg1[%c9, %c0_40] : memref<16x128xf32, #tpu.memory_space<vmem>>, vector<1x128xf32>
    %c10 = arith.constant 10 : index
    %c0_41 = arith.constant 0 : index
    %110 = vector.load %arg1[%c10, %c0_41] : memref<16x128xf32, #tpu.memory_space<vmem>>, vector<1x128xf32>
    %c11 = arith.constant 11 : index
    %c0_42 = arith.constant 0 : index
    %111 = vector.load %arg1[%c11, %c0_42] : memref<16x128xf32, #tpu.memory_space<vmem>>, vector<1x128xf32>
    %112 = arith.mulf %108, %31 : vector<1x128xf32>
    %113 = arith.mulf %109, %45 : vector<1x128xf32>
    %114 = arith.addf %112, %113 : vector<1x128xf32>
    %115 = arith.mulf %110, %47 : vector<1x128xf32>
    %116 = arith.addf %114, %115 : vector<1x128xf32>
    %c8_43 = arith.constant 8 : index
    %c0_44 = arith.constant 0 : index
    %117 = vector.load %arg3[%c8_43, %c0_44] : memref<16x128xf32, #tpu.memory_space<vmem>>, vector<1x128xf32>
    tpu.vector_store %arg3[%c8_43, %c0_44], %116 {strides = array<i32>} : memref<16x128xf32, #tpu.memory_space<vmem>>, vector<1x128xf32>,
    %118 = arith.mulf %108, %44 : vector<1x128xf32>
    %119 = arith.mulf %109, %34 : vector<1x128xf32>
    %120 = arith.addf %118, %119 : vector<1x128xf32>
    %121 = arith.mulf %110, %49 : vector<1x128xf32>
    %122 = arith.addf %120, %121 : vector<1x128xf32>
    %c9_45 = arith.constant 9 : index
    %c0_46 = arith.constant 0 : index
    %123 = vector.load %arg3[%c9_45, %c0_46] : memref<16x128xf32, #tpu.memory_space<vmem>>, vector<1x128xf32>
    tpu.vector_store %arg3[%c9_45, %c0_46], %122 {strides = array<i32>} : memref<16x128xf32, #tpu.memory_space<vmem>>, vector<1x128xf32>,
    %124 = arith.mulf %108, %46 : vector<1x128xf32>
    %125 = arith.mulf %109, %48 : vector<1x128xf32>
    %126 = arith.addf %124, %125 : vector<1x128xf32>
    %127 = arith.mulf %110, %37 : vector<1x128xf32>
    %128 = arith.addf %126, %127 : vector<1x128xf32>
    %c10_47 = arith.constant 10 : index
    %c0_48 = arith.constant 0 : index
    %129 = vector.load %arg3[%c10_47, %c0_48] : memref<16x128xf32, #tpu.memory_space<vmem>>, vector<1x128xf32>
    tpu.vector_store %arg3[%c10_47, %c0_48], %128 {strides = array<i32>} : memref<16x128xf32, #tpu.memory_space<vmem>>, vector<1x128xf32>,
    %130 = arith.mulf %108, %3 : vector<1x128xf32>
    %131 = arith.mulf %109, %4 : vector<1x128xf32>
    %132 = arith.addf %130, %131 : vector<1x128xf32>
    %133 = arith.mulf %110, %5 : vector<1x128xf32>
    %134 = arith.addf %132, %133 : vector<1x128xf32>
    %135 = arith.addf %134, %111 : vector<1x128xf32>
    %c11_49 = arith.constant 11 : index
    %c0_50 = arith.constant 0 : index
    %136 = vector.load %arg3[%c11_49, %c0_50] : memref<16x128xf32, #tpu.memory_space<vmem>>, vector<1x128xf32>
    tpu.vector_store %arg3[%c11_49, %c0_50], %135 {strides = array<i32>} : memref<16x128xf32, #tpu.memory_space<vmem>>, vector<1x128xf32>,
    %c12 = arith.constant 12 : index
    %c0_51 = arith.constant 0 : index
    %137 = vector.load %arg1[%c12, %c0_51] : memref<16x128xf32, #tpu.memory_space<vmem>>, vector<1x128xf32>
    %c13 = arith.constant 13 : index
    %c0_52 = arith.constant 0 : index
    %138 = vector.load %arg1[%c13, %c0_52] : memref<16x128xf32, #tpu.memory_space<vmem>>, vector<1x128xf32>
    %c14 = arith.constant 14 : index
    %c0_53 = arith.constant 0 : index
    %139 = vector.load %arg1[%c14, %c0_53] : memref<16x128xf32, #tpu.memory_space<vmem>>, vector<1x128xf32>
    %c15 = arith.constant 15 : index
    %c0_54 = arith.constant 0 : index
    %140 = vector.load %arg1[%c15, %c0_54] : memref<16x128xf32, #tpu.memory_space<vmem>>, vector<1x128xf32>
    %141 = arith.mulf %137, %31 : vector<1x128xf32>
    %142 = arith.mulf %138, %45 : vector<1x128xf32>
    %143 = arith.addf %141, %142 : vector<1x128xf32>
    %144 = arith.mulf %139, %47 : vector<1x128xf32>
    %145 = arith.addf %143, %144 : vector<1x128xf32>
    %c12_55 = arith.constant 12 : index
    %c0_56 = arith.constant 0 : index
    %146 = vector.load %arg3[%c12_55, %c0_56] : memref<16x128xf32, #tpu.memory_space<vmem>>, vector<1x128xf32>
    tpu.vector_store %arg3[%c12_55, %c0_56], %145 {strides = array<i32>} : memref<16x128xf32, #tpu.memory_space<vmem>>, vector<1x128xf32>,
    %147 = arith.mulf %137, %44 : vector<1x128xf32>
    %148 = arith.mulf %138, %34 : vector<1x128xf32>
    %149 = arith.addf %147, %148 : vector<1x128xf32>
    %150 = arith.mulf %139, %49 : vector<1x128xf32>
    %151 = arith.addf %149, %150 : vector<1x128xf32>
    %c13_57 = arith.constant 13 : index
    %c0_58 = arith.constant 0 : index
    %152 = vector.load %arg3[%c13_57, %c0_58] : memref<16x128xf32, #tpu.memory_space<vmem>>, vector<1x128xf32>
    tpu.vector_store %arg3[%c13_57, %c0_58], %151 {strides = array<i32>} : memref<16x128xf32, #tpu.memory_space<vmem>>, vector<1x128xf32>,
    %153 = arith.mulf %137, %46 : vector<1x128xf32>
    %154 = arith.mulf %138, %48 : vector<1x128xf32>
    %155 = arith.addf %153, %154 : vector<1x128xf32>
    %156 = arith.mulf %139, %37 : vector<1x128xf32>
    %157 = arith.addf %155, %156 : vector<1x128xf32>
    %c14_59 = arith.constant 14 : index
    %c0_60 = arith.constant 0 : index
    %158 = vector.load %arg3[%c14_59, %c0_60] : memref<16x128xf32, #tpu.memory_space<vmem>>, vector<1x128xf32>
    tpu.vector_store %arg3[%c14_59, %c0_60], %157 {strides = array<i32>} : memref<16x128xf32, #tpu.memory_space<vmem>>, vector<1x128xf32>,
    %159 = arith.mulf %137, %3 : vector<1x128xf32>
    %160 = arith.mulf %138, %4 : vector<1x128xf32>
    %161 = arith.addf %159, %160 : vector<1x128xf32>
    %162 = arith.mulf %139, %5 : vector<1x128xf32>
    %163 = arith.addf %161, %162 : vector<1x128xf32>
    %164 = arith.addf %163, %140 : vector<1x128xf32>
    %c15_61 = arith.constant 15 : index
    %c0_62 = arith.constant 0 : index
    %165 = vector.load %arg3[%c15_61, %c0_62] : memref<16x128xf32, #tpu.memory_space<vmem>>, vector<1x128xf32>
    tpu.vector_store %arg3[%c15_61, %c0_62], %164 {strides = array<i32>} : memref<16x128xf32, #tpu.memory_space<vmem>>, vector<1x128xf32>,
    return
  }
  func.func @transform_0(%arg0: i32) -> (i32, i32) {
    %c0_i32 = arith.constant 0 : i32
    %c0_i32_0 = arith.constant 0 : i32
    return %c0_i32, %arg0 : i32, i32
  }
  func.func @transform_1(%arg0: i32) -> (i32, i32) {
    %c0_i32 = arith.constant 0 : i32
    %c0_i32_0 = arith.constant 0 : i32
    return %c0_i32, %arg0 : i32, i32
  }
  func.func @transform_2(%arg0: i32) -> (i32, i32) {
    %c0_i32 = arith.constant 0 : i32
    %c0_i32_0 = arith.constant 0 : i32
    return %c0_i32, %arg0 : i32, i32
  }
}

</mosaic_0001>

<llo_original>
// kernel: tpu_custom_call.1
$region0: #{tpu_custom_call.1}
  #allocation0 [shape = 'u32[]', space=smem, size = 0x4, offset = 0x4, fixed_abs, tag = 'smem constant byte address 0x4 - core index']
  #allocation1 [shape = 'u32[144,128]{1,0:T(1,128)}', space=vmem, size = 0x12000, scoped, tag = 'internal scratch']
  %s0 = inlined_call_operand.hbm [shape: f32[16,128], index: 0, kind: input, shape index: {}]
  %s1 = inlined_call_operand.hbm [shape: f32[8,128], index: 1, kind: input, shape index: {}]
  %s2 = inlined_call_operand.hbm [shape: f32[16,128], index: 2, kind: output, shape index: {}]
  %s3 = sld [smem:[#allocation0]]
  $region26: #{tpu_custom_call.1} parent=0
    _
  %s5 = ssub.s32 1, %s3
  %s6 = scalar_select 0, %s5, %s3
  $region1: #{tpu_custom_call.1} parent=0
    #allocation2 [shape = 'u8[8192]{0}', space=vmem, size = 0x2000, scoped, tag = 'input window, operand 0, single buffered']
    #allocation3 [shape = 's32[1]{0}', space=sflag, size = 0x4, scoped, tag = 'scoped memory for tpu_custom_call.1']
    #allocation4 [shape = 's32[1]{0}', space=sflag, size = 0x4, scoped, tag = 'scoped memory for tpu_custom_call.1']
    #allocation5 [shape = 'u8[4096]{0}', space=vmem, size = 0x1000, scoped, tag = 'input window, operand 1, single buffered']
    #allocation6 [shape = 's32[1]{0}', space=sflag, size = 0x4, scoped, tag = 'scoped memory for tpu_custom_call.1']
    #allocation7 [shape = 'u8[8192]{0}', space=vmem, size = 0x2000, scoped, tag = 'output window, operand 0, single buffered']
    %7 = vsyncpa [#allocation3], 0
    %8 = vsyncpa [#allocation6], 0
    %9 = vsyncpa [#allocation4], 0
    // Predicated region
    $region2: #{tpu_custom_call.1} parent=1 // pred_check
      _
    $region3: #{tpu_custom_call.1} parent=1 // pred_check_branch
      %11 = sbr.rel (0) target = $region5
    $region4: #{tpu_custom_call.1} parent=1 // pred_region
      %s13 = ssub.s32 256, 256
      %14 = vsyncadd [#allocation3], %s13
      %s15 = sshll.u32 [#allocation2], 4
      %s16 = int_to_ptr.vmem [resolvable:$true] %s15
      %21 = dma.hbm_to_vmem [thread:$0]  %s0, 256, %s16, [#allocation3], 128, 128, 8
    $region5: #{tpu_custom_call.1} parent=1 // pred_fallthru
      _
    // Predicated region
    $region6: #{tpu_custom_call.1} parent=1 // pred_check
      _
    $region7: #{tpu_custom_call.1} parent=1 // pred_check_branch
      %23 = sbr.rel (0) target = $region9
    $region8: #{tpu_custom_call.1} parent=1 // pred_region
      %s25 = ssub.s32 128, 128
      %26 = vsyncadd [#allocation6], %s25
      %s28 = sshll.u32 [#allocation5], 4
      %s29 = int_to_ptr.vmem [resolvable:$true] %s28
      %31 = dma.hbm_to_vmem [thread:$0]  %s1, 128, %s29, [#allocation6]
    $region9: #{tpu_custom_call.1} parent=1 // pred_fallthru
      _
    // Predicated region
    $region10: #{tpu_custom_call.1} parent=1 // pred_check
      _
    $region11: #{tpu_custom_call.1} parent=1 // pred_check_branch
      %33 = sbr.rel (0) target = $region13
    $region12: #{tpu_custom_call.1} parent=1 // pred_region
      %34 = dma.done [#allocation3], 256
    $region13: #{tpu_custom_call.1} parent=1 // pred_fallthru
      _
    // Predicated region
    $region14: #{tpu_custom_call.1} parent=1 // pred_check
      _
    $region15: #{tpu_custom_call.1} parent=1 // pred_check_branch
      %36 = sbr.rel (0) target = $region17
    $region16: #{tpu_custom_call.1} parent=1 // pred_region
      %37 = dma.done [#allocation6], 128
    $region17: #{tpu_custom_call.1} parent=1 // pred_fallthru
      _
    %v38 = vld [vmem:[#allocation5] sm:$0x1]
    %v39 = vld [vmem:[#allocation5 + $0x1] sm:$0x1]
    %v40 = vld [vmem:[#allocation5 + $0x2] sm:$0x1]
    %v41 = vld [vmem:[#allocation5 + $0x3] sm:$0x1]
    %v42 = vld [vmem:[#allocation5 + $0x4] sm:$0x1]
    %v43 = vld [vmem:[#allocation5 + $0x5] sm:$0x1]
    %v44 = vmul.f32 %v38, %v38
    %v45 = vmul.f32 %v39, %v39
    %v46 = vadd.f32 %v44, %v45
    %v47 = vmul.f32 %v40, %v40
    %v48 = vadd.f32 %v46, %v47
    %v49 = vmax.f32 %v48, 0.0001
    %v50 = vrsqrt.pop %v49
    %v51 = vmul.f32 %v49, %v50
    %vm52 = vcmp.eq.f32.partialorder %v49, inf
    %v53 = vsel %vm52, %v49, %v51
    %vm54 = vcmp.eq.f32.partialorder %v49, 0.0
    %v55 = vand.u32 %v49, 2147483648
    %v56 = vsel %vm54, %v55, %v53
    %v57 = vrcp.pop %v56
    %v58 = vmul.f32 1.0, %v57
    %v59 = vand.u32 2147483647, %v56
    %vm60 = vcmp.le.f32.partialorder %v59, 0.7853982
    %vm61 = vcmp.lt.s32.totalorder %v56, 0
    %v62 = vand.u32 %v56, 2139095040
    %v63 = vshrl.u32 %v62, 23
    %v64 = vsub.s32 %v63, 127
    %v65 = vand.u32 2147483647, %v56
    %v66 = vand.u32 %v65, 8388607
    %v67 = vor.u32 %v66, 8388608
    %v68 = vsub.s32 0, %v67
    %v69 = vadd.s32 %v64, 1
    %vm70 = vcmp.gt.s32.totalorder %v69, 0
    %v71 = vsel %vm70, %v69, 0
    %v72 = vshrl.u32 %v71, 5
    %v73 = vand.u32 %v71, 31
    %v74 = vsub.s32 32, %v73
    %v75 = vshrl.u32 683565275, %v74
    %v76 = vshll.u32 683565275, %v73
    %v77 = vshrl.u32 2475754826, %v74
    %v78 = vor.u32 %v76, %v77
    %v79 = vshll.u32 2475754826, %v73
    %v80 = vshrl.u32 2131351028, %v74
    %v81 = vor.u32 %v79, %v80
    %v82 = vshll.u32 2131351028, %v73
    %v83 = vshrl.u32 2102212464, %v74
    %v84 = vor.u32 %v82, %v83
    %v85 = vshll.u32 2102212464, %v73
    %v86 = vshrl.u32 920167782, %v74
    %v87 = vor.u32 %v85, %v86
    %v88 = vshll.u32 920167782, %v73
    %v89 = vshrl.u32 1326507024, %v74
    %v90 = vor.u32 %v88, %v89
    %vm91 = vcmp.lt.s32.totalorder %v72, 1
    %vm92 = vcmp.lt.s32.totalorder %v72, 2
    %vm93 = vcmp.lt.s32.totalorder %v72, 3
    %vm94 = vcmp.lt.s32.totalorder %v72, 4
    %v95 = vsel %vm91, %v75, %v78
    %v96 = vsel %vm94, %v84, 2102212464
    %v97 = vsel %vm93, %v81, %v96
    %v98 = vsel %vm92, %v95, %v97
    %v99 = vsel %vm91, %v78, %v81
    %v100 = vsel %vm94, %v87, 920167782
    %v101 = vsel %vm93, %v84, %v100
    %v102 = vsel %vm92, %v99, %v101
    %v103 = vsel %vm91, %v81, %v84
    %v104 = vsel %vm94, %v90, 1326507024
    %v105 = vsel %vm93, %v87, %v104
    %v106 = vsel %vm92, %v103, %v105
    %v107 = vshll.u32 %v67, 8
    %v108 = vmul.u32.u64.compose %v107, %v106
    %v109 = vextract.low.u32 %v108
    %v110 = vextract.high.u32 %v108
    %v111 = vmul.u32.u64.compose %v107, %v102
    %v112 = vextract.low.u32 %v111
    %v113 = vextract.high.u32 %v111
    %v114 = vmul.u32 %v107, %v98
    %v115 = vadd.s32 %v110, %v112
    %vm116 = vc.u32 %v110, %v112
    %v117 = vadd.s32 %v113, 1
    %v118 = vsel %vm116, %v117, %v113
    %v119 = vadd.s32 %v114, %v118
    %v120 = vadd.s32 %v119, 536870912
    %v121 = vshrl.u32 %v120, 30
    %v122 = vshll.u32 %v121, 30
    %v123 = vsub.s32 %v119, %v122
    %vm124 = vcmp.lt.s32.totalorder %v123, 0
    %v125 = vsub.s32 0, %v123
    %v126 = vsel %vm124, %v125, %v123
    %v127 = vclz %v126
    %v128 = vsub.s32 %v127, 2
    %vm129 = vcmp.gt.s32.totalorder 0, %v128
    %v130 = vsel %vm129, 0, %v128
    %v131 = vsub.s32 32, %v130
    %v132 = vshll.u32 %v123, %v130
    %v133 = vshrl.u32 %v115, %v131
    %v134 = vor.u32 %v132, %v133
    %v135 = vsub.s32 4294967266, %v130
    %v136 = vadd.s32 %v135, 127
    %v137 = vshll.u32 %v136, 23
    %v138 = vor.u32 4788187, %v137
    %v139 = vand.u32 2147483647, %v138
    %v141 = vcvt.s32.f32 %v134
    %v142 = vmul.f32 %v141, %v139
    %v143 = vxor.u32 %v142, 2147483648
    %v144 = vsel %vm61, %v143, %v142
    %v145 = vsub.s32 4, %v121
    %v146 = vsel %vm61, %v145, %v121
    %v147 = vsel %vm60, %v56, %v144
    %v148 = vsel %vm60, 0, %v146
    %v149 = vcosq.f32.pop %v147
    %v150 = vsinq.f32.pop %v147
    %vm151 = vweird.f32 %v56
    %v152 = vadd.s32 %v148, 3
    %v153 = vand.u32 %v152, 3
    %vm154 = vcmp.lt.s32.totalorder %v153, 2
    %vm155 = vcmp.eq.s32.totalorder %v153, 0
    %v156 = vxor.u32 %v150, 2147483648
    %v157 = vsel %vm155, %v149, %v156
    %vm158 = vcmp.eq.s32.totalorder %v153, 2
    %v159 = vxor.u32 %v149, 2147483648
    %v160 = vsel %vm158, %v159, %v150
    %v161 = vsel %vm154, %v157, %v160
    %v162 = vsel %vm151, nan, %v161
    %v163 = vmul.f32 %v58, %v162
    %v164 = vmul.f32 %v58, %v58
    %v165 = vand.u32 2147483647, %v56
    %vm166 = vcmp.le.f32.partialorder %v165, 0.7853982
    %vm167 = vcmp.lt.s32.totalorder %v56, 0
    %v168 = vand.u32 %v56, 2139095040
    %v169 = vshrl.u32 %v168, 23
    %v170 = vsub.s32 %v169, 127
    %v171 = vand.u32 2147483647, %v56
    %v172 = vand.u32 %v171, 8388607
    %v173 = vor.u32 %v172, 8388608
    %v174 = vsub.s32 0, %v173
    %v175 = vadd.s32 %v170, 1
    %vm176 = vcmp.gt.s32.totalorder %v175, 0
    %v177 = vsel %vm176, %v175, 0
    %v178 = vshrl.u32 %v177, 5
    %v179 = vand.u32 %v177, 31
    %v180 = vsub.s32 32, %v179
    %v181 = vshrl.u32 683565275, %v180
    %v182 = vshll.u32 683565275, %v179
    %v183 = vshrl.u32 2475754826, %v180
    %v184 = vor.u32 %v182, %v183
    %v185 = vshll.u32 2475754826, %v179
    %v186 = vshrl.u32 2131351028, %v180
    %v187 = vor.u32 %v185, %v186
    %v188 = vshll.u32 2131351028, %v179
    %v189 = vshrl.u32 2102212464, %v180
    %v190 = vor.u32 %v188, %v189
    %v191 = vshll.u32 2102212464, %v179
    %v192 = vshrl.u32 920167782, %v180
    %v193 = vor.u32 %v191, %v192
    %v194 = vshll.u32 920167782, %v179
    %v195 = vshrl.u32 1326507024, %v180
    %v196 = vor.u32 %v194, %v195
    %vm197 = vcmp.lt.s32.totalorder %v178, 1
    %vm198 = vcmp.lt.s32.totalorder %v178, 2
    %vm199 = vcmp.lt.s32.totalorder %v178, 3
    %vm200 = vcmp.lt.s32.totalorder %v178, 4
    %v201 = vsel %vm197, %v181, %v184
    %v202 = vsel %vm200, %v190, 2102212464
    %v203 = vsel %vm199, %v187, %v202
    %v204 = vsel %vm198, %v201, %v203
    %v205 = vsel %vm197, %v184, %v187
    %v206 = vsel %vm200, %v193, 920167782
    %v207 = vsel %vm199, %v190, %v206
    %v208 = vsel %vm198, %v205, %v207
    %v209 = vsel %vm197, %v187, %v190
    %v210 = vsel %vm200, %v196, 1326507024
    %v211 = vsel %vm199, %v193, %v210
    %v212 = vsel %vm198, %v209, %v211
    %v213 = vshll.u32 %v173, 8
    %v214 = vmul.u32.u64.compose %v213, %v212
    %v215 = vextract.low.u32 %v214
    %v216 = vextract.high.u32 %v214
    %v217 = vmul.u32.u64.compose %v213, %v208
    %v218 = vextract.low.u32 %v217
    %v219 = vextract.high.u32 %v217
    %v220 = vmul.u32 %v213, %v204
    %v221 = vadd.s32 %v216, %v218
    %vm222 = vc.u32 %v216, %v218
    %v223 = vadd.s32 %v219, 1
    %v224 = vsel %vm222, %v223, %v219
    %v225 = vadd.s32 %v220, %v224
    %v226 = vadd.s32 %v225, 536870912
    %v227 = vshrl.u32 %v226, 30
    %v228 = vshll.u32 %v227, 30
    %v229 = vsub.s32 %v225, %v228
    %vm230 = vcmp.lt.s32.totalorder %v229, 0
    %v231 = vsub.s32 0, %v229
    %v232 = vsel %vm230, %v231, %v229
    %v233 = vclz %v232
    %v234 = vsub.s32 %v233, 2
    %vm235 = vcmp.gt.s32.totalorder 0, %v234
    %v236 = vsel %vm235, 0, %v234
    %v237 = vsub.s32 32, %v236
    %v238 = vshll.u32 %v229, %v236
    %v239 = vshrl.u32 %v221, %v237
    %v240 = vor.u32 %v238, %v239
    %v241 = vsub.s32 4294967266, %v236
    %v242 = vadd.s32 %v241, 127
    %v243 = vshll.u32 %v242, 23
    %v244 = vor.u32 4788187, %v243
    %v245 = vand.u32 2147483647, %v244
    %v247 = vcvt.s32.f32 %v240
    %v248 = vmul.f32 %v247, %v245
    %v249 = vxor.u32 %v248, 2147483648
    %v250 = vsel %vm167, %v249, %v248
    %v251 = vsub.s32 4, %v227
    %v252 = vsel %vm167, %v251, %v227
    %v253 = vsel %vm166, %v56, %v250
    %v254 = vsel %vm166, 0, %v252
    %v255 = vcosq.f32.pop %v253
    %v256 = vsinq.f32.pop %v253
    %vm257 = vweird.f32 %v56
    %v258 = vand.u32 %v254, 3
    %vm259 = vcmp.lt.s32.totalorder %v258, 2
    %vm260 = vcmp.eq.s32.totalorder %v258, 0
    %v261 = vxor.u32 %v256, 2147483648
    %v262 = vsel %vm260, %v255, %v261
    %vm263 = vcmp.eq.s32.totalorder %v258, 2
    %v264 = vxor.u32 %v255, 2147483648
    %v265 = vsel %vm263, %v264, %v256
    %v266 = vsel %vm259, %v262, %v265
    %v267 = vsel %vm257, nan, %v266
    %v268 = vsub.f32 1.0, %v267
    %v269 = vmul.f32 %v164, %v268
    %v270 = vmul.f32 %v163, %v38
    %v271 = vmul.f32 %v163, %v39
    %v272 = vmul.f32 %v163, %v40
    %v273 = vmul.f32 %v269, %v48
    %v274 = vsub.f32 1.0, %v273
    %v275 = vmul.f32 %v269, %v44
    %v276 = vadd.f32 %v275, %v274
    %v277 = vmul.f32 %v269, %v45
    %v278 = vadd.f32 %v277, %v274
    %v279 = vmul.f32 %v269, %v47
    %v280 = vadd.f32 %v279, %v274
    %v281 = vmul.f32 %v38, %v39
    %v282 = vmul.f32 %v269, %v281
    %v283 = vmul.f32 %v38, %v40
    %v284 = vmul.f32 %v269, %v283
    %v285 = vmul.f32 %v39, %v40
    %v286 = vmul.f32 %v269, %v285
    %v287 = vsub.f32 %v282, %v272
    %v288 = vadd.f32 %v282, %v272
    %v289 = vadd.f32 %v284, %v271
    %v290 = vsub.f32 %v284, %v271
    %v291 = vsub.f32 %v286, %v270
    %v292 = vadd.f32 %v286, %v270
    %v293 = vld [vmem:[#allocation2] sm:$0x1]
    %v294 = vld [vmem:[#allocation2 + $0x1] sm:$0x1]
    %v295 = vld [vmem:[#allocation2 + $0x2] sm:$0x1]
    %v296 = vld [vmem:[#allocation2 + $0x3] sm:$0x1]
    %v297 = vmul.f32 %v293, %v276
    %v298 = vmul.f32 %v294, %v288
    %v299 = vadd.f32 %v297, %v298
    %v300 = vmul.f32 %v295, %v290
    %v301 = vadd.f32 %v299, %v300
    %302 = vst [vmem:[#allocation7] sm:$0x1] %v301
    %v303 = vmul.f32 %v293, %v287
    %v304 = vmul.f32 %v294, %v278
    %v305 = vadd.f32 %v303, %v304
    %v306 = vmul.f32 %v295, %v292
    %v307 = vadd.f32 %v305, %v306
    %308 = vst [vmem:[#allocation7 + $0x1] sm:$0x1] %v307
    %v309 = vmul.f32 %v293, %v289
    %v310 = vmul.f32 %v294, %v291
    %v311 = vadd.f32 %v309, %v310
    %v312 = vmul.f32 %v295, %v280
    %v313 = vadd.f32 %v311, %v312
    %314 = vst [vmem:[#allocation7 + $0x2] sm:$0x1] %v313
    %v315 = vmul.f32 %v293, %v41
    %v316 = vmul.f32 %v294, %v42
    %v317 = vadd.f32 %v315, %v316
    %v318 = vmul.f32 %v295, %v43
    %v319 = vadd.f32 %v317, %v318
    %v320 = vadd.f32 %v319, %v296
    %321 = vst [vmem:[#allocation7 + $0x3] sm:$0x1] %v320
    %v322 = vld [vmem:[#allocation2 + $0x4] sm:$0x1]
    %v323 = vld [vmem:[#allocation2 + $0x5] sm:$0x1]
    %v324 = vld [vmem:[#allocation2 + $0x6] sm:$0x1]
    %v325 = vld [vmem:[#allocation2 + $0x7] sm:$0x1]
    %v326 = vmul.f32 %v322, %v276
    %v327 = vmul.f32 %v323, %v288
    %v328 = vadd.f32 %v326, %v327
    %v329 = vmul.f32 %v324, %v290
    %v330 = vadd.f32 %v328, %v329
    %331 = vst [vmem:[#allocation7 + $0x4] sm:$0x1] %v330
    %v332 = vmul.f32 %v322, %v287
    %v333 = vmul.f32 %v323, %v278
    %v334 = vadd.f32 %v332, %v333
    %v335 = vmul.f32 %v324, %v292
    %v336 = vadd.f32 %v334, %v335
    %337 = vst [vmem:[#allocation7 + $0x5] sm:$0x1] %v336
    %v338 = vmul.f32 %v322, %v289
    %v339 = vmul.f32 %v323, %v291
    %v340 = vadd.f32 %v338, %v339
    %v341 = vmul.f32 %v324, %v280
    %v342 = vadd.f32 %v340, %v341
    %343 = vst [vmem:[#allocation7 + $0x6] sm:$0x1] %v342
    %v344 = vmul.f32 %v322, %v41
    %v345 = vmul.f32 %v323, %v42
    %v346 = vadd.f32 %v344, %v345
    %v347 = vmul.f32 %v324, %v43
    %v348 = vadd.f32 %v346, %v347
    %v349 = vadd.f32 %v348, %v325
    %350 = vst [vmem:[#allocation7 + $0x7] sm:$0x1] %v349
    %v351 = vld [vmem:[#allocation2 + $0x8] sm:$0x1]
    %v352 = vld [vmem:[#allocation2 + $0x9] sm:$0x1]
    %v353 = vld [vmem:[#allocation2 + $0xa] sm:$0x1]
    %v354 = vld [vmem:[#allocation2 + $0xb] sm:$0x1]
    %v355 = vmul.f32 %v351, %v276
    %v356 = vmul.f32 %v352, %v288
    %v357 = vadd.f32 %v355, %v356
    %v358 = vmul.f32 %v353, %v290
    %v359 = vadd.f32 %v357, %v358
    %360 = vst [vmem:[#allocation7 + $0x8] sm:$0x1] %v359
    %v361 = vmul.f32 %v351, %v287
    %v362 = vmul.f32 %v352, %v278
    %v363 = vadd.f32 %v361, %v362
    %v364 = vmul.f32 %v353, %v292
    %v365 = vadd.f32 %v363, %v364
    %366 = vst [vmem:[#allocation7 + $0x9] sm:$0x1] %v365
    %v367 = vmul.f32 %v351, %v289
    %v368 = vmul.f32 %v352, %v291
    %v369 = vadd.f32 %v367, %v368
    %v370 = vmul.f32 %v353, %v280
    %v371 = vadd.f32 %v369, %v370
    %372 = vst [vmem:[#allocation7 + $0xa] sm:$0x1] %v371
    %v373 = vmul.f32 %v351, %v41
    %v374 = vmul.f32 %v352, %v42
    %v375 = vadd.f32 %v373, %v374
    %v376 = vmul.f32 %v353, %v43
    %v377 = vadd.f32 %v375, %v376
    %v378 = vadd.f32 %v377, %v354
    %379 = vst [vmem:[#allocation7 + $0xb] sm:$0x1] %v378
    %v380 = vld [vmem:[#allocation2 + $0xc] sm:$0x1]
    %v381 = vld [vmem:[#allocation2 + $0xd] sm:$0x1]
    %v382 = vld [vmem:[#allocation2 + $0xe] sm:$0x1]
    %v383 = vld [vmem:[#allocation2 + $0xf] sm:$0x1]
    %v384 = vmul.f32 %v380, %v276
    %v385 = vmul.f32 %v381, %v288
    %v386 = vadd.f32 %v384, %v385
    %v387 = vmul.f32 %v382, %v290
    %v388 = vadd.f32 %v386, %v387
    %389 = vst [vmem:[#allocation7 + $0xc] sm:$0x1] %v388
    %v390 = vmul.f32 %v380, %v287
    %v391 = vmul.f32 %v381, %v278
    %v392 = vadd.f32 %v390, %v391
    %v393 = vmul.f32 %v382, %v292
    %v394 = vadd.f32 %v392, %v393
    %395 = vst [vmem:[#allocation7 + $0xd] sm:$0x1] %v394
    %v396 = vmul.f32 %v380, %v289
    %v397 = vmul.f32 %v381, %v291
    %v398 = vadd.f32 %v396, %v397
    %v399 = vmul.f32 %v382, %v280
    %v400 = vadd.f32 %v398, %v399
    %401 = vst [vmem:[#allocation7 + $0xe] sm:$0x1] %v400
    %v402 = vmul.f32 %v380, %v41
    %v403 = vmul.f32 %v381, %v42
    %v404 = vadd.f32 %v402, %v403
    %v405 = vmul.f32 %v382, %v43
    %v406 = vadd.f32 %v404, %v405
    %v407 = vadd.f32 %v406, %v383
    %408 = vst [vmem:[#allocation7 + $0xf] sm:$0x1] %v407
    // Predicated region
    $region18: #{tpu_custom_call.1} parent=1 // pred_check
      _
    $region19: #{tpu_custom_call.1} parent=1 // pred_check_branch
      %410 = sbr.rel (0) target = $region21
    $region20: #{tpu_custom_call.1} parent=1 // pred_region
      %s412 = ssub.s32 256, 256
      %413 = vsyncadd [#allocation4], %s412
      %s414 = sshll.u32 [#allocation7], 4
      %s415 = int_to_ptr.vmem [resolvable:$true] %s414
      %420 = dma.vmem_to_hbm [thread:$0]  %s415, 256, %s2, [#allocation4], 128, 128, 8
    $region21: #{tpu_custom_call.1} parent=1 // pred_fallthru
      _
    // Predicated region
    $region22: #{tpu_custom_call.1} parent=1 // pred_check
      _
    $region23: #{tpu_custom_call.1} parent=1 // pred_check_branch
      %422 = sbr.rel (0) target = $region25
    $region24: #{tpu_custom_call.1} parent=1 // pred_region
      %423 = dma.done [#allocation4], 256
    $region25: #{tpu_custom_call.1} parent=1 // pred_fallthru
      _
    %424 = vsyncpa [#allocation3], 1
    %425 = vsyncpa [#allocation6], 1
    %426 = vsyncpa [#allocation4], 1

</llo_original>
